<compile_context>
chip_gen: v7x
topology: tpu7x:2x2x1
jax: 0.10.0
libtpu: 0.0.40
codegen_flags: <defaults>
</compile_context>

<pallas_src>
import functools
import math

import jax
import jax.numpy as jnp
from jax.experimental import pallas as pl
from jax.experimental.pallas import tpu as pltpu


# ----------------------------------------------------------------------------
# Reference PE buffer (used only for the correctness check in __main__;
# the kernel computes identical values on the fly).
# ----------------------------------------------------------------------------
def make_positional_encoding(d_m: int, max_len: int = 2048) -> jnp.ndarray:
    position = jnp.arange(max_len, dtype=jnp.float32)[:, None]          # (max_len, 1)
    exponent = jnp.arange(0, d_m, 2, dtype=jnp.float32)                 # (d_m//2,)
    divergence = jnp.exp(exponent * (-math.log(10000.0) / d_m))
    angles = position * divergence                                      # (max_len, d_m//2)
    pe = jnp.zeros((max_len, d_m), dtype=jnp.float32)
    pe = pe.at[:, 0::2].set(jnp.sin(angles))
    pe = pe.at[:, 1::2].set(jnp.cos(angles))
    return pe[None, :, :]                                               # (1, max_len, d_m)


# ----------------------------------------------------------------------------
# In-kernel PE tile:
#   pe[s, d] = sin(angle) if d even else cos(angle)
#   angle    = (s_start + s) * exp(-(2 * (d // 2)) * ln(10000) / d_model)
# which matches the PyTorch buffer exactly (d_model must be even).
# ----------------------------------------------------------------------------
def _pe_tile(s_start, tile_s: int, d_model: int) -> jnp.ndarray:
    pos = (jax.lax.broadcasted_iota(jnp.int32, (tile_s, d_model), 0)
           + s_start).astype(jnp.float32)
    d_idx = jax.lax.broadcasted_iota(jnp.int32, (tile_s, d_model), 1)
    pair = (d_idx >> 1).astype(jnp.float32)                              # d // 2
    inv_freq = jnp.exp(pair * jnp.float32(-2.0 * math.log(10000.0) / d_model))
    angle = pos * inv_freq
    is_even = (d_idx & 1) == 0
    return jnp.where(is_even, jnp.sin(angle), jnp.cos(angle))            # (tile_s, d_model) f32


# ----------------------------------------------------------------------------
# Kernels. Refs are (TILE_S, D): batch dim squeezed via block_shape=None.
# ----------------------------------------------------------------------------
def _pe_add_kernel(x_ref, o_ref, *, tile_s: int, d_model: int):
    """Eval mode: out = x + pe (dropout is identity)."""
    s_start = pl.program_id(1) * tile_s
    pe = _pe_tile(s_start, tile_s, d_model)
    o_ref[...] = (x_ref[...].astype(jnp.float32) + pe).astype(o_ref.dtype)


def _pe_add_dropout_kernel(x_ref, u_ref, o_ref, *, tile_s: int, d_model: int,
                           dropout_prob: float):
    """Train mode: out = inverted_dropout(x + pe, p)."""
    s_start = pl.program_id(1) * tile_s
    pe = _pe_tile(s_start, tile_s, d_model)
    y = x_ref[...].astype(jnp.float32) + pe
    keep = u_ref[...] >= jnp.float32(dropout_prob)          # P(keep) = 1 - p
    scale = jnp.float32(1.0 / (1.0 - dropout_prob))
    o_ref[...] = jnp.where(keep, y * scale, jnp.float32(0.0)).astype(o_ref.dtype)


# ----------------------------------------------------------------------------
# Tiling heuristic: ~<=2 MiB per (TILE_S, D) block, sublane-aligned rows.
# ----------------------------------------------------------------------------
def _choose_tile_s(seq_len: int, d_model: int, itemsize: int,
                   target_bytes: int = 2 * 1024 * 1024) -> int:
    max_rows = max(8, target_bytes // max(1, d_model * itemsize))
    if seq_len <= max_rows:
        return seq_len                        # whole sequence fits one small block
    # largest divisor of S that is <= max_rows and a multiple of 8 (sublane tile)
    t = (max_rows // 8) * 8
    while t >= 8:
        if seq_len % t == 0:
            return t
        t -= 8
    return seq_len                            # fallback: whole sequence as one block


# ----------------------------------------------------------------------------
# Wrapper: forward pass of PositionalEncoding
# ----------------------------------------------------------------------------
def positional_encoding_forward(x: jnp.ndarray,
                                *,
                                dropout_prob: float = 0.1,
                                training: bool = False,
                                rng_key=None) -> jnp.ndarray:
    """x : (B, S, D).  Returns dropout(x + pe[:, :S, :])."""
    B, S, D = x.shape
    assert D % 2 == 0, "d_model must be even (as required by the PyTorch module)"

    tile_s = _choose_tile_s(S, D, jnp.dtype(x.dtype).itemsize)
    n_s = S // tile_s
    grid = (B, n_s)

    # NOTE: for very narrow d_model (< 128 lanes, e.g. the demo's D=32) stores
    # are masked partial vst; a lane-dense fold would fix that but scrambles the
    # (s, d) -> PE mapping, so it is intentionally not done here.
    blk = pl.BlockSpec((None, tile_s, D), lambda b, s: (b, s, 0))
    out_shape = jax.ShapeDtypeStruct((B, S, D), x.dtype)
    cparams = pltpu.CompilerParams(
        dimension_semantics=("parallel", "parallel"))

    if not training or dropout_prob == 0.0:
        kernel = functools.partial(_pe_add_kernel, tile_s=tile_s, d_model=D)
        return pl.pallas_call(
            kernel,
            out_shape=out_shape,
            grid=grid,
            in_specs=[blk],
            out_specs=blk,
            compiler_params=cparams,
        )(x)

    if rng_key is None:
        rng_key = jax.random.PRNGKey(0)
    u = jax.random.uniform(rng_key, (B, S, D), dtype=jnp.float32)

    kernel = functools.partial(_pe_add_dropout_kernel, tile_s=tile_s, d_model=D,
                               dropout_prob=float(dropout_prob))
    return pl.pallas_call(
        kernel,
        out_shape=out_shape,
        grid=grid,
        in_specs=[blk, blk],
        out_specs=blk,
        compiler_params=cparams,
    )(x, u)


# ----------------------------------------------------------------------------
# Demo / self-test
# ----------------------------------------------------------------------------
if __name__ == "__main__":
    B, S, D = 2, 8, 32
    MAX_LEN = 2048
    DROPOUT_P = 0.1

    key = jax.random.PRNGKey(0)
    kx, kd = jax.random.split(key)
    x = jax.random.normal(kx, (B, S, D), dtype=jnp.float32)

    # Eval-mode forward (dropout identity) -- matches module.eval().
    out = positional_encoding_forward(x, dropout_prob=DROPOUT_P, training=False)
    out = jax.block_until_ready(out)

    pe = make_positional_encoding(D, max_len=MAX_LEN)
    ref = x + pe[:, :S, :]
    assert jnp.allclose(out, ref, atol=1e-4, rtol=1e-4), "eval-mode mismatch vs reference"

    # Training-mode forward (inverted dropout applied in-kernel).
    out_train = positional_encoding_forward(
        x, dropout_prob=DROPOUT_P, training=True, rng_key=kd)
    out_train = jax.block_until_ready(out_train)
    assert out_train.shape == (B, S, D)
    scale = 1.0 / (1.0 - DROPOUT_P)
    ok = jnp.all((out_train == 0.0) | (jnp.abs(out_train - ref * scale) < 1e-3))
    assert bool(ok), "train-mode mismatch vs reference"

    print("KERNEL_OK")
</pallas_src>

<mosaic_0001>
module attributes {stable_mosaic.version = 11 : i64} {
  func.func @_pe_add_kernel(%arg0: i32, %arg1: i32, %arg2: memref<1x8x32xf32, #tpu.memory_space<vmem>>, %arg3: memref<1x8x32xf32, #tpu.memory_space<vmem>>) attributes {dimension_semantics = [#tpu.dimension_semantics<parallel>, #tpu.dimension_semantics<parallel>], iteration_bounds = array<i64: 2, 1>, scalar_prefetch = 0 : i64, scratch_operands = 0 : i64, tpu.core_type = #tpu.core_type<tc>, window_params = [{transform_indices = @transform_0, window_bounds = array<i64: 1, 8, 32>}, {transform_indices = @transform_1, window_bounds = array<i64: 1, 8, 32>}]} {
    %c8_i32 = arith.constant 8 : i32
    %0 = arith.muli %arg1, %c8_i32 : i32
    %1 = tpu.iota {dimensions = array<i32: 0>} : vector<8x32xi32>
    %2 = vector.broadcast %0 : i32 to vector<8x32xi32>
    %3 = arith.addi %1, %2 : vector<8x32xi32>
    %4 = arith.sitofp %3 : vector<8x32xi32> to vector<8x32xf32>
    %5 = tpu.iota {dimensions = array<i32: 1>} : vector<8x32xi32>
    %c1_i32 = arith.constant 1 : i32
    %6 = vector.broadcast %c1_i32 : i32 to vector<8x32xi32>
    %7 = arith.shrsi %5, %6 : vector<8x32xi32>
    %8 = arith.sitofp %7 : vector<8x32xi32> to vector<8x32xf32>
    %cst = arith.constant -0.575646281 : f32
    %9 = vector.broadcast %cst : f32 to vector<8x32xf32>
    %10 = arith.mulf %8, %9 : vector<8x32xf32>
    %11 = math.exp %10 : vector<8x32xf32>
    %12 = arith.mulf %4, %11 : vector<8x32xf32>
    %c1_i32_0 = arith.constant 1 : i32
    %13 = vector.broadcast %c1_i32_0 : i32 to vector<8x32xi32>
    %14 = arith.andi %5, %13 : vector<8x32xi32>
    %c0_i32 = arith.constant 0 : i32
    %15 = vector.broadcast %c0_i32 : i32 to vector<8x32xi32>
    %16 = arith.cmpi eq, %14, %15 : vector<8x32xi32>
    %17 = math.sin %12 : vector<8x32xf32>
    %18 = math.cos %12 : vector<8x32xf32>
    %19 = arith.select %16, %17, %18 : vector<8x32xi1>, vector<8x32xf32>
    %c0 = arith.constant 0 : index
    %c0_1 = arith.constant 0 : index
    %c0_2 = arith.constant 0 : index
    %20 = vector.load %arg2[%c0, %c0_1, %c0_2] : memref<1x8x32xf32, #tpu.memory_space<vmem>>, vector<1x8x32xf32>
    %21 = vector.shape_cast %20 : vector<1x8x32xf32> to vector<8x32xf32>
    %22 = arith.addf %21, %19 : vector<8x32xf32>
    %c0_3 = arith.constant 0 : index
    %c0_4 = arith.constant 0 : index
    %c0_5 = arith.constant 0 : index
    %23 = vector.load %arg3[%c0_3, %c0_4, %c0_5] : memref<1x8x32xf32, #tpu.memory_space<vmem>>, vector<1x8x32xf32>
    %24 = vector.shape_cast %23 : vector<1x8x32xf32> to vector<8x32xf32>
    %25 = vector.shape_cast %22 : vector<8x32xf32> to vector<1x8x32xf32>
    tpu.vector_store %arg3[%c0_3, %c0_4, %c0_5], %25 {strides = array<i32>} : memref<1x8x32xf32, #tpu.memory_space<vmem>>, vector<1x8x32xf32>,
    return
  }
  func.func @transform_0(%arg0: i32, %arg1: i32) -> (i32, i32, i32) {
    %c0_i32 = arith.constant 0 : i32
    %c0_i32_0 = arith.constant 0 : i32
    return %arg0, %arg1, %c0_i32 : i32, i32, i32
  }
  func.func @transform_1(%arg0: i32, %arg1: i32) -> (i32, i32, i32) {
    %c0_i32 = arith.constant 0 : i32
    %c0_i32_0 = arith.constant 0 : i32
    return %arg0, %arg1, %c0_i32 : i32, i32, i32
  }
}

</mosaic_0001>

<llo_original>
// kernel: tpu_custom_call.1
$region0: #{tpu_custom_call.1}
  #allocation0 [shape = 'u32[]', space=smem, size = 0x4, offset = 0x4, fixed_abs, tag = 'smem constant byte address 0x4 - core index']
  #allocation1 [shape = 'u32[144,128]{1,0:T(1,128)}', space=vmem, size = 0x12000, scoped, tag = 'internal scratch']
  %s0 = inlined_call_operand.hbm [shape: f32[2,8,32], index: 0, kind: input, shape index: {}]
  %s1 = inlined_call_operand.hbm [shape: f32[2,8,32], index: 1, kind: output, shape index: {}]
  %s2 = sld [smem:[#allocation0]]
  $region41: #{tpu_custom_call.1} parent=0
    _
  %s4 = ssub.s32 1, %s2
  %s5 = scalar_select 0, %s4, %s2
  $region1: #{tpu_custom_call.1} parent=0
    #allocation2 [shape = 'u8[8192]{0}', space=vmem, size = 0x2000, scoped, tag = 'input window, operand 0']
    #allocation3 [shape = 's32[2]{0}', space=sflag, size = 0x8, scoped, tag = 'scoped memory for tpu_custom_call.1']
    #allocation4 [shape = 's32[2]{0}', space=sflag, size = 0x8, scoped, tag = 'scoped memory for tpu_custom_call.1']
    #allocation5 [shape = 'u8[8192]{0}', space=vmem, size = 0x2000, scoped, tag = 'output window, operand 0']
    %6 = vsyncpa [#allocation3], 0
    %s7 = scalar_lea.sflag [#allocation3], 1
    %8 = vsyncpa %s7, 0
    %9 = vsyncpa [#allocation4], 0
    %s10 = scalar_lea.sflag [#allocation4], 1
    %11 = vsyncpa %s10, 0
    loop: start=0, step=1, limit=4
    $region2: #{tpu_custom_call.1} parent=1 // loop_pre_header
      _
    $region3: #{tpu_custom_call.1} parent=1 // loop_header
      %s13 = sphi 0, %s17
      %p14 = scmp.ge.s32.totalorder %s13, 4
      %s20 = sphi 0, %s32
      %s21 = sphi 0, %s28
      %s22 = sphi 0, %s20
      %s23 = sphi 0, %s21
      %s24 = sphi 0, %s22
      %s25 = sphi 0, %s23
      %s37 = sphi 0, %s39
      %s40 = sphi 0, %s37
      %s41 = sphi 0, %s40
      %s57 = sphi 0, %s41
      %s65 = sphi 0, %s67
      %s68 = sphi 0, %s65
      %s69 = sphi 0, %s68
      %s85 = sphi 0, %s69
    $region4: #{tpu_custom_call.1} parent=1 // loop_header_branch
      %16 = sbr.rel (%p14) target = $region8
    $region5: #{tpu_custom_call.1} parent=1 // loop_body
      %s18 = ssub.s32 %s13, 1
      %s19 = ssub.s32 %s13, 2
      %s26 = sadd.s32 1, %s21
      %p27 = scmp.ge.s32.totalorder %s26, 1
      %s28 = scalar_select %p27, 0, %s26
      %s29 = sadd.s32 1, %s20
      %s30 = scalar_select %p27, %s29, %s20
      %p31 = scmp.ge.s32.totalorder %s30, 2
      %s32 = scalar_select %p31, 0, %s30
      %s33 = ssub.s32 %s20, %s32
      %s34 = ssub.s32 %s21, %s28
      %s35 = sor.u32 %s33, %s34
      %p36 = scmp.eq.s32.totalorder %s35, 0
      %s38 = sadd.s32 %s37, 1
      %s39 = scalar_select %p36, %s37, %s38
      %p42 = pneg %p36
      %p43 = scmp.eq.s32.totalorder %s13, 1
      %p44 = por %p42, %p43
      %p45 = scmp.ne.s32.totalorder %s37, %s40
      %p46 = scmp.eq.s32.totalorder %s13, 0
      %p47 = por %p45, %p46
      %p48 = scmp.ne.s32.totalorder %s37, %s40
      %p49 = scmp.eq.s32.totalorder %s18, 1
      %p50 = por %p48, %p49
      %p51 = scmp.ne.s32.totalorder %s40, %s41
      %p52 = scmp.eq.s32.totalorder %s18, 0
      %p53 = por %p51, %p52
      %p54 = scmp.ne.s32.totalorder %s40, %s41
      %p55 = scmp.eq.s32.totalorder %s19, 1
      %p56 = por %p54, %p55
      %p58 = scmp.ne.s32.totalorder %s41, %s57
      %p59 = scmp.eq.s32.totalorder %s19, 0
      %p60 = por %p58, %p59
      %s61 = ssub.s32 %s20, %s32
      %s62 = ssub.s32 %s21, %s28
      %s63 = sor.u32 %s61, %s62
      %p64 = scmp.eq.s32.totalorder %s63, 0
      %s66 = sadd.s32 %s65, 1
      %s67 = scalar_select %p64, %s65, %s66
      %p70 = pneg %p64
      %p71 = scmp.eq.s32.totalorder %s13, 1
      %p72 = por %p70, %p71
      %p73 = scmp.ne.s32.totalorder %s65, %s68
      %p74 = scmp.eq.s32.totalorder %s13, 0
      %p75 = por %p73, %p74
      %p76 = scmp.ne.s32.totalorder %s65, %s68
      %p77 = scmp.eq.s32.totalorder %s18, 1
      %p78 = por %p76, %p77
      %p79 = scmp.ne.s32.totalorder %s68, %s69
      %p80 = scmp.eq.s32.totalorder %s18, 0
      %p81 = por %p79, %p80
      %p82 = scmp.ne.s32.totalorder %s68, %s69
      %p83 = scmp.eq.s32.totalorder %s19, 1
      %p84 = por %p82, %p83
      %p86 = scmp.ne.s32.totalorder %s69, %s85
      %p87 = scmp.eq.s32.totalorder %s19, 0
      %p88 = por %p86, %p87
      %p89 = scmp.le.s32.totalorder 1, %s13
      %p90 = scmp.lt.s32.totalorder %s13, 3
      %p91 = pnand %p89, %p90
      %p92 = pneg %p91
      // Predicated region
      $region9: #{tpu_custom_call.1} parent=5 // pred_check
        _
      $region10: #{tpu_custom_call.1} parent=5 // pred_check_branch
        %94 = sbr.rel (%p91) target = $region12
      $region11: #{tpu_custom_call.1} parent=5 // pred_region
        %s95 = ssub.s32 %s13, 1
      $region12: #{tpu_custom_call.1} parent=5 // pred_fallthru
        _
      %p96 = scmp.lt.s32.totalorder %s13, 2
      // Predicated region
      $region13: #{tpu_custom_call.1} parent=5 // pred_check
        %p97 = pneg %p96
      $region14: #{tpu_custom_call.1} parent=5 // pred_check_branch
        %99 = sbr.rel (%p97) target = $region16
      $region15: #{tpu_custom_call.1} parent=5 // pred_region
        // Predicated region
        $region17: #{tpu_custom_call.1} parent=15 // pred_check
          %p100 = pneg %p47
        $region18: #{tpu_custom_call.1} parent=15 // pred_check_branch
          %102 = sbr.rel (%p100) target = $region20
        $region19: #{tpu_custom_call.1} parent=15 // pred_region
          %s103 = sand.u32 %s37, 1
          %s104 = scalar_lea.sflag [#allocation3], %s103
          %s105 = sand.u32 %s37, 1
          %s106 = smul.addr %s105, 8
          %s107 = scalar_lea.vmem [#allocation2], %s106
          %s109 = ssub.s32 128, 128
          %110 = vsyncadd %s104, %s109
          %s111 = sadd.s32 %s21, %s20
          %s112 = smul.addr %s111, 128
          %s113 = scalar_lea.hbm %s0, %s112
          %s115 = sshll.u32 %s107, 4
          %s116 = int_to_ptr.vmem [resolvable:$true] %s115
          %118 = dma.hbm_to_vmem [thread:$0]  %s113, 128, %s116, %s104
        $region20: #{tpu_custom_call.1} parent=15 // pred_fallthru
          _
      $region16: #{tpu_custom_call.1} parent=5 // pred_fallthru
        _
      %p119 = scmp.le.s32.totalorder 1, %s13
      %p120 = scmp.lt.s32.totalorder %s13, 3
      %p121 = pnand %p119, %p120
      %p122 = pneg %p121
      // Predicated region
      $region21: #{tpu_custom_call.1} parent=5 // pred_check
        _
      $region22: #{tpu_custom_call.1} parent=5 // pred_check_branch
        %124 = sbr.rel (%p121) target = $region24
      $region23: #{tpu_custom_call.1} parent=5 // pred_region
        %s125 = ssub.s32 %s13, 1
        %s126 = sand.u32 %s40, 1
        %s127 = scalar_lea.sflag [#allocation3], %s126
        %s128 = sand.u32 %s40, 1
        %s129 = smul.addr %s128, 8
        %s130 = scalar_lea.vmem [#allocation2], %s129
        // Predicated region
        $region25: #{tpu_custom_call.1} parent=23 // pred_check
          %p131 = pneg %p53
        $region26: #{tpu_custom_call.1} parent=23 // pred_check_branch
          %133 = sbr.rel (%p131) target = $region28
        $region27: #{tpu_custom_call.1} parent=23 // pred_region
          %134 = dma.done %s127, 128
        $region28: #{tpu_custom_call.1} parent=23 // pred_fallthru
          _
        %s135 = sand.u32 %s40, 1
        %s136 = scalar_lea.sflag [#allocation3], %s135
        %s137 = sand.u32 %s40, 1
        %s138 = smul.addr %s137, 8
        %s139 = scalar_lea.vmem [#allocation2], %s138
        %p140 = pneg %p53
        %p141 = pneg %p50
        %p142 = pneg %p81
        %p143 = pneg %p78
        %s144 = sand.u32 %s68, 1
        %s145 = scalar_lea.sflag [#allocation4], %s144
        %s146 = sand.u32 %s68, 1
        %s147 = smul.addr %s146, 8
        %s148 = scalar_lea.vmem [#allocation5], %s147
        %s149 = smul.u32 %s23, 8
        %v150 = vlaneseq
        %v151 = vshrl.u32 %v150, 7
        %v152 = vstv %s149
        %v153 = vadd.s32 %v151, %v152
        %v154 = vcvt.s32.f32 %v153
        %v155 = vlaneseq
        %v156 = vand.u32 %v155, 127
        %v157 = vshra.s32 %v156, 1
        %v158 = vcvt.s32.f32 %v157
        %v159 = vmul.f32 %v158, -0.5756463
        %v160 = vmul.f32 %v159, 1.442695
        %v161 = vpow.pop %v160
        %v162 = vmul.f32 %v154, %v161
        %v163 = vand.u32 %v156, 1
        %vm164 = vcmp.eq.s32.totalorder %v163, 0
        %v165 = vand.u32 2147483647, %v162
        %vm166 = vcmp.le.f32.partialorder %v165, 0.7853982
        %vm167 = vcmp.lt.s32.totalorder %v162, 0
        %v168 = vand.u32 %v162, 2139095040
        %v169 = vshrl.u32 %v168, 23
        %v170 = vsub.s32 %v169, 127
        %v171 = vand.u32 2147483647, %v162
        %v172 = vand.u32 %v171, 8388607
        %v173 = vor.u32 %v172, 8388608
        %v174 = vsub.s32 0, %v173
        %v175 = vadd.s32 %v170, 1
        %vm176 = vcmp.gt.s32.totalorder %v175, 0
        %v177 = vsel %vm176, %v175, 0
        %v178 = vshrl.u32 %v177, 5
        %v179 = vand.u32 %v177, 31
        %v180 = vsub.s32 32, %v179
        %v181 = vshrl.u32 683565275, %v180
        %v182 = vshll.u32 683565275, %v179
        %v183 = vshrl.u32 2475754826, %v180
        %v184 = vor.u32 %v182, %v183
        %v185 = vshll.u32 2475754826, %v179
        %v186 = vshrl.u32 2131351028, %v180
        %v187 = vor.u32 %v185, %v186
        %v188 = vshll.u32 2131351028, %v179
        %v189 = vshrl.u32 2102212464, %v180
        %v190 = vor.u32 %v188, %v189
        %v191 = vshll.u32 2102212464, %v179
        %v192 = vshrl.u32 920167782, %v180
        %v193 = vor.u32 %v191, %v192
        %v194 = vshll.u32 920167782, %v179
        %v195 = vshrl.u32 1326507024, %v180
        %v196 = vor.u32 %v194, %v195
        %vm197 = vcmp.lt.s32.totalorder %v178, 1
        %vm198 = vcmp.lt.s32.totalorder %v178, 2
        %vm199 = vcmp.lt.s32.totalorder %v178, 3
        %vm200 = vcmp.lt.s32.totalorder %v178, 4
        %v201 = vsel %vm197, %v181, %v184
        %v202 = vsel %vm200, %v190, 2102212464
        %v203 = vsel %vm199, %v187, %v202
        %v204 = vsel %vm198, %v201, %v203
        %v205 = vsel %vm197, %v184, %v187
        %v206 = vsel %vm200, %v193, 920167782
        %v207 = vsel %vm199, %v190, %v206
        %v208 = vsel %vm198, %v205, %v207
        %v209 = vsel %vm197, %v187, %v190
        %v210 = vsel %vm200, %v196, 1326507024
        %v211 = vsel %vm199, %v193, %v210
        %v212 = vsel %vm198, %v209, %v211
        %v213 = vshll.u32 %v173, 8
        %v214 = vmul.u32.u64.compose %v213, %v212
        %v215 = vextract.low.u32 %v214
        %v216 = vextract.high.u32 %v214
        %v217 = vmul.u32.u64.compose %v213, %v208
        %v218 = vextract.low.u32 %v217
        %v219 = vextract.high.u32 %v217
        %v220 = vmul.u32 %v213, %v204
        %v221 = vadd.s32 %v216, %v218
        %vm222 = vc.u32 %v216, %v218
        %v223 = vadd.s32 %v219, 1
        %v224 = vsel %vm222, %v223, %v219
        %v225 = vadd.s32 %v220, %v224
        %v226 = vadd.s32 %v225, 536870912
        %v227 = vshrl.u32 %v226, 30
        %v228 = vshll.u32 %v227, 30
        %v229 = vsub.s32 %v225, %v228
        %vm230 = vcmp.lt.s32.totalorder %v229, 0
        %v231 = vsub.s32 0, %v229
        %v232 = vsel %vm230, %v231, %v229
        %v233 = vclz %v232
        %v234 = vsub.s32 %v233, 2
        %vm235 = vcmp.gt.s32.totalorder 0, %v234
        %v236 = vsel %vm235, 0, %v234
        %v237 = vsub.s32 32, %v236
        %v238 = vshll.u32 %v229, %v236
        %v239 = vshrl.u32 %v221, %v237
        %v240 = vor.u32 %v238, %v239
        %v241 = vsub.s32 4294967266, %v236
        %v242 = vadd.s32 %v241, 127
        %v243 = vshll.u32 %v242, 23
        %v244 = vor.u32 4788187, %v243
        %v245 = vand.u32 2147483647, %v244
        %v247 = vcvt.s32.f32 %v240
        %v248 = vmul.f32 %v247, %v245
        %v249 = vxor.u32 %v248, 2147483648
        %v250 = vsel %vm167, %v249, %v248
        %v251 = vsub.s32 4, %v227
        %v252 = vsel %vm167, %v251, %v227
        %v253 = vsel %vm166, %v162, %v250
        %v254 = vsel %vm166, 0, %v252
        %v255 = vcosq.f32.pop %v253
        %v256 = vsinq.f32.pop %v253
        %vm257 = vweird.f32 %v162
        %v258 = vadd.s32 %v254, 3
        %v259 = vand.u32 %v258, 3
        %vm260 = vcmp.lt.s32.totalorder %v259, 2
        %vm261 = vcmp.eq.s32.totalorder %v259, 0
        %v262 = vxor.u32 %v256, 2147483648
        %v263 = vsel %vm261, %v255, %v262
        %vm264 = vcmp.eq.s32.totalorder %v259, 2
        %v265 = vxor.u32 %v255, 2147483648
        %v266 = vsel %vm264, %v265, %v256
        %v267 = vsel %vm260, %v263, %v266
        %v268 = vsel %vm257, nan, %v267
        %v269 = vand.u32 2147483647, %v162
        %vm270 = vcmp.le.f32.partialorder %v269, 0.7853982
        %vm271 = vcmp.lt.s32.totalorder %v162, 0
        %v272 = vand.u32 %v162, 2139095040
        %v273 = vshrl.u32 %v272, 23
        %v274 = vsub.s32 %v273, 127
        %v275 = vand.u32 2147483647, %v162
        %v276 = vand.u32 %v275, 8388607
        %v277 = vor.u32 %v276, 8388608
        %v278 = vsub.s32 0, %v277
        %v279 = vadd.s32 %v274, 1
        %vm280 = vcmp.gt.s32.totalorder %v279, 0
        %v281 = vsel %vm280, %v279, 0
        %v282 = vshrl.u32 %v281, 5
        %v283 = vand.u32 %v281, 31
        %v284 = vsub.s32 32, %v283
        %v285 = vshrl.u32 683565275, %v284
        %v286 = vshll.u32 683565275, %v283
        %v287 = vshrl.u32 2475754826, %v284
        %v288 = vor.u32 %v286, %v287
        %v289 = vshll.u32 2475754826, %v283
        %v290 = vshrl.u32 2131351028, %v284
        %v291 = vor.u32 %v289, %v290
        %v292 = vshll.u32 2131351028, %v283
        %v293 = vshrl.u32 2102212464, %v284
        %v294 = vor.u32 %v292, %v293
        %v295 = vshll.u32 2102212464, %v283
        %v296 = vshrl.u32 920167782, %v284
        %v297 = vor.u32 %v295, %v296
        %v298 = vshll.u32 920167782, %v283
        %v299 = vshrl.u32 1326507024, %v284
        %v300 = vor.u32 %v298, %v299
        %vm301 = vcmp.lt.s32.totalorder %v282, 1
        %vm302 = vcmp.lt.s32.totalorder %v282, 2
        %vm303 = vcmp.lt.s32.totalorder %v282, 3
        %vm304 = vcmp.lt.s32.totalorder %v282, 4
        %v305 = vsel %vm301, %v285, %v288
        %v306 = vsel %vm304, %v294, 2102212464
        %v307 = vsel %vm303, %v291, %v306
        %v308 = vsel %vm302, %v305, %v307
        %v309 = vsel %vm301, %v288, %v291
        %v310 = vsel %vm304, %v297, 920167782
        %v311 = vsel %vm303, %v294, %v310
        %v312 = vsel %vm302, %v309, %v311
        %v313 = vsel %vm301, %v291, %v294
        %v314 = vsel %vm304, %v300, 1326507024
        %v315 = vsel %vm303, %v297, %v314
        %v316 = vsel %vm302, %v313, %v315
        %v317 = vshll.u32 %v277, 8
        %v318 = vmul.u32.u64.compose %v317, %v316
        %v319 = vextract.low.u32 %v318
        %v320 = vextract.high.u32 %v318
        %v321 = vmul.u32.u64.compose %v317, %v312
        %v322 = vextract.low.u32 %v321
        %v323 = vextract.high.u32 %v321
        %v324 = vmul.u32 %v317, %v308
        %v325 = vadd.s32 %v320, %v322
        %vm326 = vc.u32 %v320, %v322
        %v327 = vadd.s32 %v323, 1
        %v328 = vsel %vm326, %v327, %v323
        %v329 = vadd.s32 %v324, %v328
        %v330 = vadd.s32 %v329, 536870912
        %v331 = vshrl.u32 %v330, 30
        %v332 = vshll.u32 %v331, 30
        %v333 = vsub.s32 %v329, %v332
        %vm334 = vcmp.lt.s32.totalorder %v333, 0
        %v335 = vsub.s32 0, %v333
        %v336 = vsel %vm334, %v335, %v333
        %v337 = vclz %v336
        %v338 = vsub.s32 %v337, 2
        %vm339 = vcmp.gt.s32.totalorder 0, %v338
        %v340 = vsel %vm339, 0, %v338
        %v341 = vsub.s32 32, %v340
        %v342 = vshll.u32 %v333, %v340
        %v343 = vshrl.u32 %v325, %v341
        %v344 = vor.u32 %v342, %v343
        %v345 = vsub.s32 4294967266, %v340
        %v346 = vadd.s32 %v345, 127
        %v347 = vshll.u32 %v346, 23
        %v348 = vor.u32 4788187, %v347
        %v349 = vand.u32 2147483647, %v348
        %v351 = vcvt.s32.f32 %v344
        %v352 = vmul.f32 %v351, %v349
        %v353 = vxor.u32 %v352, 2147483648
        %v354 = vsel %vm271, %v353, %v352
        %v355 = vsub.s32 4, %v331
        %v356 = vsel %vm271, %v355, %v331
        %v357 = vsel %vm270, %v162, %v354
        %v358 = vsel %vm270, 0, %v356
        %v359 = vcosq.f32.pop %v357
        %v360 = vsinq.f32.pop %v357
        %vm361 = vweird.f32 %v162
        %v362 = vand.u32 %v358, 3
        %vm363 = vcmp.lt.s32.totalorder %v362, 2
        %vm364 = vcmp.eq.s32.totalorder %v362, 0
        %v365 = vxor.u32 %v360, 2147483648
        %v366 = vsel %vm364, %v359, %v365
        %vm367 = vcmp.eq.s32.totalorder %v362, 2
        %v368 = vxor.u32 %v359, 2147483648
        %v369 = vsel %vm367, %v368, %v360
        %v370 = vsel %vm363, %v366, %v369
        %v371 = vsel %vm361, nan, %v370
        %v372 = vsel %vm164, %v268, %v371
        %v373 = vld [vmem:[%s130] sm:$0xff]
        %v374 = vadd.f32 %v373, %v372
        %vm375 = vcmask 261120
        %376 = vst.msk [vmem:[%s148] sm:$0xff] %vm375, %v374
        %s377 = sand.u32 %s68, 1
        %s378 = scalar_lea.sflag [#allocation4], %s377
        %s379 = sand.u32 %s68, 1
        %s380 = smul.addr %s379, 8
        %s381 = scalar_lea.vmem [#allocation5], %s380
        // Predicated region
        $region29: #{tpu_custom_call.1} parent=23 // pred_check
          %p382 = pneg %p78
        $region30: #{tpu_custom_call.1} parent=23 // pred_check_branch
          %384 = sbr.rel (%p382) target = $region32
        $region31: #{tpu_custom_call.1} parent=23 // pred_region
          %s386 = ssub.s32 128, 128
          %387 = vsyncadd %s378, %s386
          %s388 = sadd.s32 %s23, %s22
          %s389 = smul.addr %s388, 128
          %s390 = scalar_lea.hbm %s1, %s389
          %s392 = sshll.u32 %s381, 4
          %s393 = int_to_ptr.vmem [resolvable:$true] %s392
          %395 = dma.vmem_to_hbm [thread:$0]  %s393, 128, %s390, %s378
        $region32: #{tpu_custom_call.1} parent=23 // pred_fallthru
          _
      $region24: #{tpu_custom_call.1} parent=5 // pred_fallthru
        _
      %p396 = scmp.le.s32.totalorder 2, %s13
      // Predicated region
      $region33: #{tpu_custom_call.1} parent=5 // pred_check
        %p397 = pneg %p396
      $region34: #{tpu_custom_call.1} parent=5 // pred_check_branch
        %399 = sbr.rel (%p397) target = $region36
      $region35: #{tpu_custom_call.1} parent=5 // pred_region
        %s400 = ssub.s32 %s13, 2
        // Predicated region
        $region37: #{tpu_custom_call.1} parent=35 // pred_check
          %p401 = pneg %p84
        $region38: #{tpu_custom_call.1} parent=35 // pred_check_branch
          %403 = sbr.rel (%p401) target = $region40
        $region39: #{tpu_custom_call.1} parent=35 // pred_region
          %s404 = sand.u32 %s69, 1
          %s405 = scalar_lea.sflag [#allocation4], %s404
          %s406 = sand.u32 %s69, 1
          %s407 = smul.addr %s406, 8
          %s408 = scalar_lea.vmem [#allocation5], %s407
          %409 = dma.done %s405, 128
        $region40: #{tpu_custom_call.1} parent=35 // pred_fallthru
          _
      $region36: #{tpu_custom_call.1} parent=5 // pred_fallthru
        _
    $region6: #{tpu_custom_call.1} parent=1 // loop_footer
      %s17 = sadd.s32 1, %s13
    $region7: #{tpu_custom_call.1} parent=1 // loop_footer_branch
      %12 = sbr.rel target = $region3
    $region8: #{tpu_custom_call.1} parent=1 // loop_exit
      _
    %410 = vsyncpa [#allocation3], 1
    %s411 = scalar_lea.sflag [#allocation3], 1
    %412 = vsyncpa %s411, 1
    %413 = vsyncpa [#allocation4], 1
    %s414 = scalar_lea.sflag [#allocation4], 1
    %415 = vsyncpa %s414, 1

</llo_original>
